<compile_context>
chip_gen: v7x
topology: tpu7x:2x2x1
jax: 0.10.0
libtpu: 0.0.40
codegen_flags: <defaults>
</compile_context>

<pallas_src>
import functools

import jax
import jax.numpy as jnp
import numpy as np
from jax import lax
from jax.experimental import pallas as pl
from jax.experimental.pallas import tpu as pltpu

LEAKY_SLOPE = 0.2
BN_EPS = 1e-5

# Taps of the k=4, s=2, p=1 transposed conv per output row/col parity:
#   _TAPS[parity] = ((kernel_index, window_offset_into_zero-padded_h), ...)
_TAPS = (((3, 0), (1, 1)),      # even output rows / cols
         ((2, 1), (0, 2)))      # odd  output rows / cols


def _round_up(v, m):
    return ((v + m - 1) // m) * m


# ---------------------------------------------------------------------------
# Fused Pallas kernel (whole batch, single invocation)
# ---------------------------------------------------------------------------
def _fused_unet_kernel(xc_ref, wd_ref, wu_ref, hmask_ref, yvalid_ref,
                       gamma_ref, beta_ref, o_ref, *, n, wh, lh, su, cnt):
    """LeakyReLU(x) -> Conv2d(4,2,1) -> ReLU -> ConvTranspose2d(4,2,1) -> BatchNorm.

    xc_ref:     (n, 4, cin_p, lc)        bf16 stride-parity canvases of padded lrelu(x)
    wd_ref:     (inner_p, 16*cin_p)      bf16 down-conv weight, K ordered (kh, kw, ci)
    wu_ref:     (2, 2, outer, 4*inner_p) bf16 up-conv weight per output phase
    hmask_ref:  (1, n*lh)                f32  1.0 on the interior of the padded-h grid
    yvalid_ref: (1, n*su)                f32  1.0 on the true (non-slack) output columns
    gamma_ref:  (outer, 1)               f32  BN affine scale
    beta_ref:   (outer, 1)               f32  BN affine shift
    o_ref:      (outer, 2*2*n*su)        f32  normalized output, lanes = (pr, pc, img, su)
    """
    outer = o_ref.shape[0]

    # ---- down conv: one K = 16*cin_p matmul, lanes = (image, lh position) -------
    phases = [[xc_ref[i, p] for p in range(4)] for i in range(n)]   # (cin_p, lc) bf16
    tap_blocks = []
    for kh in range(4):
        for kw in range(4):
            p = 2 * (kh % 2) + (kw % 2)
            off = (kh // 2) * wh + (kw // 2)
            tap_blocks.append(jnp.concatenate(
                [phases[i][p][:, off:off + lh] for i in range(n)], axis=1))
    rhs_d = jnp.concatenate(tap_blocks, axis=0)                 # (16*cin_p, n*lh) bf16
    h = jnp.dot(wd_ref[...], rhs_d, preferred_element_type=jnp.float32)
    # ReLU (the uprelu) and force the exact zero halo of the padded-h grid.
    h = jnp.maximum(h, 0.0) * hmask_ref[...]                    # (inner_p, n*lh) f32
    hb = h.astype(jnp.bfloat16)

    # ---- 9 shifted views of h (shared by the 4 output phases), lanes=(img, su) --
    shifted = {}
    for dr in range(3):
        for dc in range(3):
            off = dr * wh + dc
            shifted[(dr, dc)] = jnp.concatenate(
                [hb[:, i * lh + off:i * lh + off + su] for i in range(n)], axis=1)

    # ---- transposed conv, phase decomposed (4 taps / phase) + BN partial sums ---
    yvalid = yvalid_ref[...]                                    # (1, n*su)
    yphs = []
    ssum = jnp.zeros((outer, 1), jnp.float32)
    ssq = jnp.zeros((outer, 1), jnp.float32)
    for pr in range(2):
        for pc in range(2):
            blocks = [shifted[(dr, dc)]
                      for (_, dr) in _TAPS[pr] for (_, dc) in _TAPS[pc]]
            rhs_u = jnp.concatenate(blocks, axis=0)             # (4*inner_p, n*su) bf16
            yph = jnp.dot(wu_ref[pr, pc], rhs_u,
                          preferred_element_type=jnp.float32)   # (outer, n*su) f32
            yphs.append(yph)
            ym = yph * yvalid                                   # mask slack columns
            ssum = ssum + jnp.sum(ym, axis=1, keepdims=True)
            ssq = ssq + jnp.sum(ym * yph, axis=1, keepdims=True)

    # ---- BatchNorm (training-mode batch statistics), fully in-kernel ------------
    inv_cnt = 1.0 / cnt
    mean = ssum * inv_cnt
    var = jnp.maximum(ssq * inv_cnt - mean * mean, 0.0)         # biased variance
    scale = gamma_ref[...] * lax.rsqrt(var + BN_EPS)            # (outer, 1)
    shift = beta_ref[...] - mean * scale                        # (outer, 1)

    y_all = jnp.concatenate(yphs, axis=1)                       # (outer, 4*n*su) f32
    o_ref[...] = y_all * scale + shift                          # one lane-dense store


# ---------------------------------------------------------------------------
# Wrapper
# ---------------------------------------------------------------------------
def unet_innermost_forward(x, w_down, w_up_t, gamma, beta):
    """x: (N, input_nc, H, W) f32 -> (N, input_nc + outer_nc, H, W) f32."""
    n, cin, hh, ww = x.shape
    inner = w_down.shape[0]
    outer = w_up_t.shape[1]
    oh, ow = hh // 2, ww // 2
    wh = ow + 2                  # row width of the padded-h / up-output flat grids
    lh = (oh + 3) * wh           # padded-h grid (flat) incl. one slack row
    su = oh * wh                 # per-phase up-conv output (flat)
    lc = (oh + 5) * wh           # canvas length (flat)

    cin_p = _round_up(cin, 16)     # bf16 sublane tile
    inner_p = _round_up(inner, 16)

    # ---- host-side layout plumbing (cheap, fused by XLA) ----------------------
    xlr = jnp.where(x >= 0, x, LEAKY_SLOPE * x)                     # LeakyReLU once
    xlr = jnp.pad(xlr, ((0, 0), (0, cin_p - cin), (0, 0), (0, 0)))  # channel pad
    xp = jnp.pad(xlr, ((0, 0), (0, 0), (1, 1), (1, 1)))             # conv padding
    canvases = []
    for a in range(2):
        for b in range(2):
            ph = xp[:, :, a::2, b::2]                               # (n, cin_p, oh+1, ow+1)
            ph = jnp.pad(ph, ((0, 0), (0, 0), (1, 3), (1, 0)))      # -> (oh+5, wh)
            canvases.append(ph.reshape(n, cin_p, lc))
    xc = jnp.stack(canvases, axis=1).astype(jnp.bfloat16)           # (n, 4, cin_p, lc)

    # Down-conv weight as (inner_p, 16*cin_p), K ordered (kh, kw, ci); bf16 for MXU.
    wd = jnp.pad(w_down, ((0, inner_p - inner), (0, cin_p - cin), (0, 0), (0, 0)))
    wd_mat = wd.transpose(0, 2, 3, 1).reshape(inner_p, 16 * cin_p).astype(jnp.bfloat16)

    # Up-conv weight per output phase: (2, 2, outer, 4*inner_p), bf16.
    wu = jnp.pad(w_up_t, ((0, inner_p - inner), (0, 0), (0, 0), (0, 0)))
    rows = []
    for pr in range(2):
        cols_w = []
        for pc in range(2):
            taps = [wu[:, :, kh, kw].T
                    for (kh, _) in _TAPS[pr] for (kw, _) in _TAPS[pc]]
            cols_w.append(jnp.concatenate(taps, axis=1))            # (outer, 4*inner_p)
        rows.append(jnp.stack(cols_w, axis=0))
    wu_pack = jnp.stack(rows, axis=0).astype(jnp.bfloat16)

    # Static validity masks (trace-time constants), tiled over the batch.
    r_idx = np.arange(lh) // wh
    c_idx = np.arange(lh) % wh
    hmask1 = ((r_idx >= 1) & (r_idx <= oh) & (c_idx >= 1) & (c_idx <= ow))
    hmask = jnp.asarray(np.tile(hmask1.astype(np.float32), n).reshape(1, n * lh))
    yvalid1 = (np.arange(su) % wh < ow).astype(np.float32)
    yvalid = jnp.asarray(np.tile(yvalid1, n).reshape(1, n * su))

    cnt = float(n * hh * ww)
    kernel = functools.partial(_fused_unet_kernel, n=n, wh=wh, lh=lh, su=su, cnt=cnt)

    y = pl.pallas_call(
        kernel,
        out_shape=jax.ShapeDtypeStruct((outer, 2 * 2 * n * su), jnp.float32),
        grid=(1,),
        in_specs=[
            pl.BlockSpec((n, 4, cin_p, lc), lambda i: (0, 0, 0, 0)),
            pl.BlockSpec((inner_p, 16 * cin_p), lambda i: (0, 0)),
            pl.BlockSpec((2, 2, outer, 4 * inner_p), lambda i: (0, 0, 0, 0)),
            pl.BlockSpec((1, n * lh), lambda i: (0, 0)),
            pl.BlockSpec((1, n * su), lambda i: (0, 0)),
            pl.BlockSpec((outer, 1), lambda i: (0, 0)),
            pl.BlockSpec((outer, 1), lambda i: (0, 0)),
        ],
        out_specs=pl.BlockSpec((outer, 2 * 2 * n * su), lambda i: (0, 0)),
        compiler_params=pltpu.CompilerParams(
            dimension_semantics=("arbitrary",)),
    )(xc, wd_mat, wu_pack, hmask, yvalid,
      gamma.reshape(outer, 1).astype(jnp.float32),
      beta.reshape(outer, 1).astype(jnp.float32))

    # ---- single layout fix-up back to NCHW + skip concat ----------------------
    y = y.reshape(outer, 2, 2, n, oh, wh)[..., :ow]     # drop slack columns
    y = y.transpose(3, 0, 4, 1, 5, 2).reshape(n, outer, hh, ww)
    return jnp.concatenate([x, y], axis=1)              # torch.cat([x, model(x)], 1)


# ---------------------------------------------------------------------------
# Pure-JAX reference (same bf16-operand / f32-accumulate precision model)
# ---------------------------------------------------------------------------
def _reference_forward(x, w_down, w_up_t, gamma, beta):
    xlr = jnp.where(x >= 0, x, LEAKY_SLOPE * x)
    h = lax.conv_general_dilated(
        xlr.astype(jnp.bfloat16), w_down.astype(jnp.bfloat16),
        window_strides=(2, 2), padding=((1, 1), (1, 1)),
        dimension_numbers=("NCHW", "OIHW", "NCHW"),
        preferred_element_type=jnp.float32)
    h = jnp.maximum(h, 0.0)
    w_conv = jnp.flip(w_up_t, axis=(2, 3)).transpose(1, 0, 2, 3)
    y = lax.conv_general_dilated(
        h.astype(jnp.bfloat16), w_conv.astype(jnp.bfloat16),
        window_strides=(1, 1), padding=((2, 2), (2, 2)), lhs_dilation=(2, 2),
        dimension_numbers=("NCHW", "OIHW", "NCHW"),
        preferred_element_type=jnp.float32)
    mean = jnp.mean(y, axis=(0, 2, 3), keepdims=True)
    var = jnp.mean((y - mean) ** 2, axis=(0, 2, 3), keepdims=True)
    y = (y - mean) * lax.rsqrt(var + BN_EPS)
    y = y * gamma.reshape(1, -1, 1, 1) + beta.reshape(1, -1, 1, 1)
    return jnp.concatenate([x, y], axis=1)


# ---------------------------------------------------------------------------
if __name__ == "__main__":
    # innermost block: outer_nc = 4, inner_nc = 8, input_nc defaults to outer_nc
    outer_nc, inner_nc, input_nc = 4, 8, 4
    N, H, W = 2, 16, 16

    key = jax.random.PRNGKey(0)
    kx, kd, ku, kg, kb = jax.random.split(key, 5)
    x = jax.random.normal(kx, (N, input_nc, H, W), dtype=jnp.float32)
    # downconv: Conv2d(input_nc, inner_nc, 4, 2, 1, bias=False) -> (O, I, kH, kW)
    w_down = 0.1 * jax.random.normal(kd, (inner_nc, input_nc, 4, 4), dtype=jnp.float32)
    # upconv: ConvTranspose2d(inner_nc, outer_nc, 4, 2, 1, bias=False) -> (I, O, kH, kW)
    w_up = 0.1 * jax.random.normal(ku, (inner_nc, outer_nc, 4, 4), dtype=jnp.float32)
    # BatchNorm2d(outer_nc) affine params
    gamma = 1.0 + 0.1 * jax.random.normal(kg, (outer_nc,), dtype=jnp.float32)
    beta = 0.1 * jax.random.normal(kb, (outer_nc,), dtype=jnp.float32)

    out = jax.jit(unet_innermost_forward)(x, w_down, w_up, gamma, beta)
    out = jax.block_until_ready(out)

    ref = _reference_forward(x, w_down, w_up, gamma, beta)
    assert out.shape == (N, input_nc + outer_nc, H, W), out.shape
    err = float(jnp.max(jnp.abs(out - ref)))
    assert err < 1e-2, f"max abs err {err}"
    print("KERNEL_OK")
</pallas_src>

<mosaic_0001>
module attributes {stable_mosaic.version = 11 : i64} {
  func.func @_fused_unet_kernel(%arg0: i32, %arg1: memref<2x4x16x130xbf16, #tpu.memory_space<vmem>>, %arg2: memref<16x256xbf16, #tpu.memory_space<vmem>>, %arg3: memref<2x2x4x64xbf16, #tpu.memory_space<vmem>>, %arg4: memref<1x220xf32, #tpu.memory_space<vmem>>, %arg5: memref<1x160xf32, #tpu.memory_space<vmem>>, %arg6: memref<4x1xf32, #tpu.memory_space<vmem>>, %arg7: memref<4x1xf32, #tpu.memory_space<vmem>>, %arg8: memref<4x640xf32, #tpu.memory_space<vmem>>) attributes {dimension_semantics = [#tpu.dimension_semantics<arbitrary>], iteration_bounds = array<i64: 1>, scalar_prefetch = 0 : i64, scratch_operands = 0 : i64, tpu.core_type = #tpu.core_type<tc>, window_params = [{pipeline_mode = #tpu.pipeline_mode<synchronous>, transform_indices = @transform_0, window_bounds = array<i64: 2, 4, 16, 130>}, {pipeline_mode = #tpu.pipeline_mode<synchronous>, transform_indices = @transform_1, window_bounds = array<i64: 16, 256>}, {pipeline_mode = #tpu.pipeline_mode<synchronous>, transform_indices = @transform_2, window_bounds = array<i64: 2, 2, 4, 64>}, {pipeline_mode = #tpu.pipeline_mode<synchronous>, transform_indices = @transform_3, window_bounds = array<i64: 1, 220>}, {pipeline_mode = #tpu.pipeline_mode<synchronous>, transform_indices = @transform_4, window_bounds = array<i64: 1, 160>}, {pipeline_mode = #tpu.pipeline_mode<synchronous>, transform_indices = @transform_5, window_bounds = array<i64: 4, 1>}, {pipeline_mode = #tpu.pipeline_mode<synchronous>, transform_indices = @transform_6, window_bounds = array<i64: 4, 1>}, {pipeline_mode = #tpu.pipeline_mode<synchronous>, transform_indices = @transform_7, window_bounds = array<i64: 4, 640>}]} {
    %c0 = arith.constant 0 : index
    %c0_0 = arith.constant 0 : index
    %c0_1 = arith.constant 0 : index
    %c0_2 = arith.constant 0 : index
    %0 = vector.load %arg1[%c0, %c0_0, %c0_1, %c0_2] : memref<2x4x16x130xbf16, #tpu.memory_space<vmem>>, vector<1x1x16x130xbf16>
    %1 = vector.shape_cast %0 : vector<1x1x16x130xbf16> to vector<16x130xbf16>
    %c0_3 = arith.constant 0 : index
    %c1 = arith.constant 1 : index
    %c0_4 = arith.constant 0 : index
    %c0_5 = arith.constant 0 : index
    %2 = vector.load %arg1[%c0_3, %c1, %c0_4, %c0_5] : memref<2x4x16x130xbf16, #tpu.memory_space<vmem>>, vector<1x1x16x130xbf16>
    %3 = vector.shape_cast %2 : vector<1x1x16x130xbf16> to vector<16x130xbf16>
    %c0_6 = arith.constant 0 : index
    %c2 = arith.constant 2 : index
    %c0_7 = arith.constant 0 : index
    %c0_8 = arith.constant 0 : index
    %4 = vector.load %arg1[%c0_6, %c2, %c0_7, %c0_8] : memref<2x4x16x130xbf16, #tpu.memory_space<vmem>>, vector<1x1x16x130xbf16>
    %5 = vector.shape_cast %4 : vector<1x1x16x130xbf16> to vector<16x130xbf16>
    %c0_9 = arith.constant 0 : index
    %c3 = arith.constant 3 : index
    %c0_10 = arith.constant 0 : index
    %c0_11 = arith.constant 0 : index
    %6 = vector.load %arg1[%c0_9, %c3, %c0_10, %c0_11] : memref<2x4x16x130xbf16, #tpu.memory_space<vmem>>, vector<1x1x16x130xbf16>
    %7 = vector.shape_cast %6 : vector<1x1x16x130xbf16> to vector<16x130xbf16>
    %c1_12 = arith.constant 1 : index
    %c0_13 = arith.constant 0 : index
    %c0_14 = arith.constant 0 : index
    %c0_15 = arith.constant 0 : index
    %8 = vector.load %arg1[%c1_12, %c0_13, %c0_14, %c0_15] : memref<2x4x16x130xbf16, #tpu.memory_space<vmem>>, vector<1x1x16x130xbf16>
    %9 = vector.shape_cast %8 : vector<1x1x16x130xbf16> to vector<16x130xbf16>
    %c1_16 = arith.constant 1 : index
    %c1_17 = arith.constant 1 : index
    %c0_18 = arith.constant 0 : index
    %c0_19 = arith.constant 0 : index
    %10 = vector.load %arg1[%c1_16, %c1_17, %c0_18, %c0_19] : memref<2x4x16x130xbf16, #tpu.memory_space<vmem>>, vector<1x1x16x130xbf16>
    %11 = vector.shape_cast %10 : vector<1x1x16x130xbf16> to vector<16x130xbf16>
    %c1_20 = arith.constant 1 : index
    %c2_21 = arith.constant 2 : index
    %c0_22 = arith.constant 0 : index
    %c0_23 = arith.constant 0 : index
    %12 = vector.load %arg1[%c1_20, %c2_21, %c0_22, %c0_23] : memref<2x4x16x130xbf16, #tpu.memory_space<vmem>>, vector<1x1x16x130xbf16>
    %13 = vector.shape_cast %12 : vector<1x1x16x130xbf16> to vector<16x130xbf16>
    %c1_24 = arith.constant 1 : index
    %c3_25 = arith.constant 3 : index
    %c0_26 = arith.constant 0 : index
    %c0_27 = arith.constant 0 : index
    %14 = vector.load %arg1[%c1_24, %c3_25, %c0_26, %c0_27] : memref<2x4x16x130xbf16, #tpu.memory_space<vmem>>, vector<1x1x16x130xbf16>
    %15 = vector.shape_cast %14 : vector<1x1x16x130xbf16> to vector<16x130xbf16>
    %16 = vector.extract_strided_slice %1 {offsets = [0, 0], sizes = [16, 110], strides = [1, 1]} : vector<16x130xbf16> to vector<16x110xbf16>
    %17 = vector.extract_strided_slice %9 {offsets = [0, 0], sizes = [16, 110], strides = [1, 1]} : vector<16x130xbf16> to vector<16x110xbf16>
    %18 = tpu.concatenate %16, %17 in 1 : vector<16x110xbf16>, vector<16x110xbf16> -> vector<16x220xbf16>
    %19 = vector.extract_strided_slice %3 {offsets = [0, 0], sizes = [16, 110], strides = [1, 1]} : vector<16x130xbf16> to vector<16x110xbf16>
    %20 = vector.extract_strided_slice %11 {offsets = [0, 0], sizes = [16, 110], strides = [1, 1]} : vector<16x130xbf16> to vector<16x110xbf16>
    %21 = tpu.concatenate %19, %20 in 1 : vector<16x110xbf16>, vector<16x110xbf16> -> vector<16x220xbf16>
    %22 = vector.extract_strided_slice %1 {offsets = [0, 1], sizes = [16, 110], strides = [1, 1]} : vector<16x130xbf16> to vector<16x110xbf16>
    %23 = vector.extract_strided_slice %9 {offsets = [0, 1], sizes = [16, 110], strides = [1, 1]} : vector<16x130xbf16> to vector<16x110xbf16>
    %24 = tpu.concatenate %22, %23 in 1 : vector<16x110xbf16>, vector<16x110xbf16> -> vector<16x220xbf16>
    %25 = vector.extract_strided_slice %3 {offsets = [0, 1], sizes = [16, 110], strides = [1, 1]} : vector<16x130xbf16> to vector<16x110xbf16>
    %26 = vector.extract_strided_slice %11 {offsets = [0, 1], sizes = [16, 110], strides = [1, 1]} : vector<16x130xbf16> to vector<16x110xbf16>
    %27 = tpu.concatenate %25, %26 in 1 : vector<16x110xbf16>, vector<16x110xbf16> -> vector<16x220xbf16>
    %28 = vector.extract_strided_slice %5 {offsets = [0, 0], sizes = [16, 110], strides = [1, 1]} : vector<16x130xbf16> to vector<16x110xbf16>
    %29 = vector.extract_strided_slice %13 {offsets = [0, 0], sizes = [16, 110], strides = [1, 1]} : vector<16x130xbf16> to vector<16x110xbf16>
    %30 = tpu.concatenate %28, %29 in 1 : vector<16x110xbf16>, vector<16x110xbf16> -> vector<16x220xbf16>
    %31 = vector.extract_strided_slice %7 {offsets = [0, 0], sizes = [16, 110], strides = [1, 1]} : vector<16x130xbf16> to vector<16x110xbf16>
    %32 = vector.extract_strided_slice %15 {offsets = [0, 0], sizes = [16, 110], strides = [1, 1]} : vector<16x130xbf16> to vector<16x110xbf16>
    %33 = tpu.concatenate %31, %32 in 1 : vector<16x110xbf16>, vector<16x110xbf16> -> vector<16x220xbf16>
    %34 = vector.extract_strided_slice %5 {offsets = [0, 1], sizes = [16, 110], strides = [1, 1]} : vector<16x130xbf16> to vector<16x110xbf16>
    %35 = vector.extract_strided_slice %13 {offsets = [0, 1], sizes = [16, 110], strides = [1, 1]} : vector<16x130xbf16> to vector<16x110xbf16>
    %36 = tpu.concatenate %34, %35 in 1 : vector<16x110xbf16>, vector<16x110xbf16> -> vector<16x220xbf16>
    %37 = vector.extract_strided_slice %7 {offsets = [0, 1], sizes = [16, 110], strides = [1, 1]} : vector<16x130xbf16> to vector<16x110xbf16>
    %38 = vector.extract_strided_slice %15 {offsets = [0, 1], sizes = [16, 110], strides = [1, 1]} : vector<16x130xbf16> to vector<16x110xbf16>
    %39 = tpu.concatenate %37, %38 in 1 : vector<16x110xbf16>, vector<16x110xbf16> -> vector<16x220xbf16>
    %40 = vector.extract_strided_slice %1 {offsets = [0, 10], sizes = [16, 110], strides = [1, 1]} : vector<16x130xbf16> to vector<16x110xbf16>
    %41 = vector.extract_strided_slice %9 {offsets = [0, 10], sizes = [16, 110], strides = [1, 1]} : vector<16x130xbf16> to vector<16x110xbf16>
    %42 = tpu.concatenate %40, %41 in 1 : vector<16x110xbf16>, vector<16x110xbf16> -> vector<16x220xbf16>
    %43 = vector.extract_strided_slice %3 {offsets = [0, 10], sizes = [16, 110], strides = [1, 1]} : vector<16x130xbf16> to vector<16x110xbf16>
    %44 = vector.extract_strided_slice %11 {offsets = [0, 10], sizes = [16, 110], strides = [1, 1]} : vector<16x130xbf16> to vector<16x110xbf16>
    %45 = tpu.concatenate %43, %44 in 1 : vector<16x110xbf16>, vector<16x110xbf16> -> vector<16x220xbf16>
    %46 = vector.extract_strided_slice %1 {offsets = [0, 11], sizes = [16, 110], strides = [1, 1]} : vector<16x130xbf16> to vector<16x110xbf16>
    %47 = vector.extract_strided_slice %9 {offsets = [0, 11], sizes = [16, 110], strides = [1, 1]} : vector<16x130xbf16> to vector<16x110xbf16>
    %48 = tpu.concatenate %46, %47 in 1 : vector<16x110xbf16>, vector<16x110xbf16> -> vector<16x220xbf16>
    %49 = vector.extract_strided_slice %3 {offsets = [0, 11], sizes = [16, 110], strides = [1, 1]} : vector<16x130xbf16> to vector<16x110xbf16>
    %50 = vector.extract_strided_slice %11 {offsets = [0, 11], sizes = [16, 110], strides = [1, 1]} : vector<16x130xbf16> to vector<16x110xbf16>
    %51 = tpu.concatenate %49, %50 in 1 : vector<16x110xbf16>, vector<16x110xbf16> -> vector<16x220xbf16>
    %52 = vector.extract_strided_slice %5 {offsets = [0, 10], sizes = [16, 110], strides = [1, 1]} : vector<16x130xbf16> to vector<16x110xbf16>
    %53 = vector.extract_strided_slice %13 {offsets = [0, 10], sizes = [16, 110], strides = [1, 1]} : vector<16x130xbf16> to vector<16x110xbf16>
    %54 = tpu.concatenate %52, %53 in 1 : vector<16x110xbf16>, vector<16x110xbf16> -> vector<16x220xbf16>
    %55 = vector.extract_strided_slice %7 {offsets = [0, 10], sizes = [16, 110], strides = [1, 1]} : vector<16x130xbf16> to vector<16x110xbf16>
    %56 = vector.extract_strided_slice %15 {offsets = [0, 10], sizes = [16, 110], strides = [1, 1]} : vector<16x130xbf16> to vector<16x110xbf16>
    %57 = tpu.concatenate %55, %56 in 1 : vector<16x110xbf16>, vector<16x110xbf16> -> vector<16x220xbf16>
    %58 = vector.extract_strided_slice %5 {offsets = [0, 11], sizes = [16, 110], strides = [1, 1]} : vector<16x130xbf16> to vector<16x110xbf16>
    %59 = vector.extract_strided_slice %13 {offsets = [0, 11], sizes = [16, 110], strides = [1, 1]} : vector<16x130xbf16> to vector<16x110xbf16>
    %60 = tpu.concatenate %58, %59 in 1 : vector<16x110xbf16>, vector<16x110xbf16> -> vector<16x220xbf16>
    %61 = vector.extract_strided_slice %7 {offsets = [0, 11], sizes = [16, 110], strides = [1, 1]} : vector<16x130xbf16> to vector<16x110xbf16>
    %62 = vector.extract_strided_slice %15 {offsets = [0, 11], sizes = [16, 110], strides = [1, 1]} : vector<16x130xbf16> to vector<16x110xbf16>
    %63 = tpu.concatenate %61, %62 in 1 : vector<16x110xbf16>, vector<16x110xbf16> -> vector<16x220xbf16>
    %64 = tpu.concatenate %18, %21, %24, %27, %30, %33, %36, %39, %42, %45, %48, %51, %54, %57, %60, %63 in 0 : vector<16x220xbf16>, vector<16x220xbf16>, vector<16x220xbf16>, vector<16x220xbf16>, vector<16x220xbf16>, vector<16x220xbf16>, vector<16x220xbf16>, vector<16x220xbf16>, vector<16x220xbf16>, vector<16x220xbf16>, vector<16x220xbf16>, vector<16x220xbf16>, vector<16x220xbf16>, vector<16x220xbf16>, vector<16x220xbf16>, vector<16x220xbf16> -> vector<256x220xbf16>
    %c0_28 = arith.constant 0 : index
    %c0_29 = arith.constant 0 : index
    %65 = vector.load %arg2[%c0_28, %c0_29] : memref<16x256xbf16, #tpu.memory_space<vmem>>, vector<16x256xbf16>
    %cst = arith.constant dense<0.000000e+00> : vector<16x220xf32>
    %66 = tpu.matmul %65, %64, %cst {dimension_numbers = #tpu.dot_dimension_numbers<[1], [0], [0], [1], [0, 0, 1, 1], [], []>} : vector<16x256xbf16>, vector<256x220xbf16>, vector<16x220xf32> -> vector<16x220xf32>
    %cst_30 = arith.constant 0.000000e+00 : f32
    %67 = vector.broadcast %cst_30 : f32 to vector<16x220xf32>
    %68 = arith.maximumf %66, %67 : vector<16x220xf32>
    %c0_31 = arith.constant 0 : index
    %c0_32 = arith.constant 0 : index
    %69 = vector.load %arg4[%c0_31, %c0_32] : memref<1x220xf32, #tpu.memory_space<vmem>>, vector<1x220xf32>
    %70 = vector.broadcast %69 : vector<1x220xf32> to vector<16x220xf32>
    %71 = arith.mulf %68, %70 : vector<16x220xf32>
    %72 = arith.truncf %71 : vector<16x220xf32> to vector<16x220xbf16>
    %73 = vector.extract_strided_slice %72 {offsets = [0, 0], sizes = [16, 80], strides = [1, 1]} : vector<16x220xbf16> to vector<16x80xbf16>
    %74 = vector.extract_strided_slice %72 {offsets = [0, 110], sizes = [16, 80], strides = [1, 1]} : vector<16x220xbf16> to vector<16x80xbf16>
    %75 = tpu.concatenate %73, %74 in 1 : vector<16x80xbf16>, vector<16x80xbf16> -> vector<16x160xbf16>
    %76 = vector.extract_strided_slice %72 {offsets = [0, 1], sizes = [16, 80], strides = [1, 1]} : vector<16x220xbf16> to vector<16x80xbf16>
    %77 = vector.extract_strided_slice %72 {offsets = [0, 111], sizes = [16, 80], strides = [1, 1]} : vector<16x220xbf16> to vector<16x80xbf16>
    %78 = tpu.concatenate %76, %77 in 1 : vector<16x80xbf16>, vector<16x80xbf16> -> vector<16x160xbf16>
    %79 = vector.extract_strided_slice %72 {offsets = [0, 2], sizes = [16, 80], strides = [1, 1]} : vector<16x220xbf16> to vector<16x80xbf16>
    %80 = vector.extract_strided_slice %72 {offsets = [0, 112], sizes = [16, 80], strides = [1, 1]} : vector<16x220xbf16> to vector<16x80xbf16>
    %81 = tpu.concatenate %79, %80 in 1 : vector<16x80xbf16>, vector<16x80xbf16> -> vector<16x160xbf16>
    %82 = vector.extract_strided_slice %72 {offsets = [0, 10], sizes = [16, 80], strides = [1, 1]} : vector<16x220xbf16> to vector<16x80xbf16>
    %83 = vector.extract_strided_slice %72 {offsets = [0, 120], sizes = [16, 80], strides = [1, 1]} : vector<16x220xbf16> to vector<16x80xbf16>
    %84 = tpu.concatenate %82, %83 in 1 : vector<16x80xbf16>, vector<16x80xbf16> -> vector<16x160xbf16>
    %85 = vector.extract_strided_slice %72 {offsets = [0, 11], sizes = [16, 80], strides = [1, 1]} : vector<16x220xbf16> to vector<16x80xbf16>
    %86 = vector.extract_strided_slice %72 {offsets = [0, 121], sizes = [16, 80], strides = [1, 1]} : vector<16x220xbf16> to vector<16x80xbf16>
    %87 = tpu.concatenate %85, %86 in 1 : vector<16x80xbf16>, vector<16x80xbf16> -> vector<16x160xbf16>
    %88 = vector.extract_strided_slice %72 {offsets = [0, 12], sizes = [16, 80], strides = [1, 1]} : vector<16x220xbf16> to vector<16x80xbf16>
    %89 = vector.extract_strided_slice %72 {offsets = [0, 122], sizes = [16, 80], strides = [1, 1]} : vector<16x220xbf16> to vector<16x80xbf16>
    %90 = tpu.concatenate %88, %89 in 1 : vector<16x80xbf16>, vector<16x80xbf16> -> vector<16x160xbf16>
    %91 = vector.extract_strided_slice %72 {offsets = [0, 20], sizes = [16, 80], strides = [1, 1]} : vector<16x220xbf16> to vector<16x80xbf16>
    %92 = vector.extract_strided_slice %72 {offsets = [0, 130], sizes = [16, 80], strides = [1, 1]} : vector<16x220xbf16> to vector<16x80xbf16>
    %93 = tpu.concatenate %91, %92 in 1 : vector<16x80xbf16>, vector<16x80xbf16> -> vector<16x160xbf16>
    %94 = vector.extract_strided_slice %72 {offsets = [0, 21], sizes = [16, 80], strides = [1, 1]} : vector<16x220xbf16> to vector<16x80xbf16>
    %95 = vector.extract_strided_slice %72 {offsets = [0, 131], sizes = [16, 80], strides = [1, 1]} : vector<16x220xbf16> to vector<16x80xbf16>
    %96 = tpu.concatenate %94, %95 in 1 : vector<16x80xbf16>, vector<16x80xbf16> -> vector<16x160xbf16>
    %97 = vector.extract_strided_slice %72 {offsets = [0, 22], sizes = [16, 80], strides = [1, 1]} : vector<16x220xbf16> to vector<16x80xbf16>
    %98 = vector.extract_strided_slice %72 {offsets = [0, 132], sizes = [16, 80], strides = [1, 1]} : vector<16x220xbf16> to vector<16x80xbf16>
    %99 = tpu.concatenate %97, %98 in 1 : vector<16x80xbf16>, vector<16x80xbf16> -> vector<16x160xbf16>
    %c0_33 = arith.constant 0 : index
    %c0_34 = arith.constant 0 : index
    %100 = vector.load %arg5[%c0_33, %c0_34] : memref<1x160xf32, #tpu.memory_space<vmem>>, vector<1x160xf32>
    %cst_35 = arith.constant 0.000000e+00 : f32
    %101 = vector.broadcast %cst_35 : f32 to vector<4x1xf32>
    %cst_36 = arith.constant 0.000000e+00 : f32
    %102 = vector.broadcast %cst_36 : f32 to vector<4x1xf32>
    %103 = tpu.concatenate %75, %78, %84, %87 in 0 : vector<16x160xbf16>, vector<16x160xbf16>, vector<16x160xbf16>, vector<16x160xbf16> -> vector<64x160xbf16>
    %c0_37 = arith.constant 0 : index
    %c0_38 = arith.constant 0 : index
    %c0_39 = arith.constant 0 : index
    %c0_40 = arith.constant 0 : index
    %104 = vector.load %arg3[%c0_37, %c0_38, %c0_39, %c0_40] : memref<2x2x4x64xbf16, #tpu.memory_space<vmem>>, vector<1x1x4x64xbf16>
    %105 = vector.shape_cast %104 : vector<1x1x4x64xbf16> to vector<4x64xbf16>
    %cst_41 = arith.constant dense<0.000000e+00> : vector<4x160xf32>
    %106 = tpu.matmul %105, %103, %cst_41 {dimension_numbers = #tpu.dot_dimension_numbers<[1], [0], [0], [1], [0, 0, 1, 1], [], []>} : vector<4x64xbf16>, vector<64x160xbf16>, vector<4x160xf32> -> vector<4x160xf32>
    %107 = vector.broadcast %100 : vector<1x160xf32> to vector<4x160xf32>
    %108 = arith.mulf %106, %107 : vector<4x160xf32>
    %cst_42 = arith.constant dense<0.000000e+00> : vector<4xf32>
    %109 = vector.multi_reduction <add>, %108, %cst_42 [1] : vector<4x160xf32> to vector<4xf32>
    %110 = vector.shape_cast %109 : vector<4xf32> to vector<4x1xf32>
    %111 = arith.addf %101, %110 : vector<4x1xf32>
    %112 = arith.mulf %108, %106 : vector<4x160xf32>
    %cst_43 = arith.constant dense<0.000000e+00> : vector<4xf32>
    %113 = vector.multi_reduction <add>, %112, %cst_43 [1] : vector<4x160xf32> to vector<4xf32>
    %114 = vector.shape_cast %113 : vector<4xf32> to vector<4x1xf32>
    %115 = arith.addf %102, %114 : vector<4x1xf32>
    %116 = tpu.concatenate %78, %81, %87, %90 in 0 : vector<16x160xbf16>, vector<16x160xbf16>, vector<16x160xbf16>, vector<16x160xbf16> -> vector<64x160xbf16>
    %c0_44 = arith.constant 0 : index
    %c1_45 = arith.constant 1 : index
    %c0_46 = arith.constant 0 : index
    %c0_47 = arith.constant 0 : index
    %117 = vector.load %arg3[%c0_44, %c1_45, %c0_46, %c0_47] : memref<2x2x4x64xbf16, #tpu.memory_space<vmem>>, vector<1x1x4x64xbf16>
    %118 = vector.shape_cast %117 : vector<1x1x4x64xbf16> to vector<4x64xbf16>
    %cst_48 = arith.constant dense<0.000000e+00> : vector<4x160xf32>
    %119 = tpu.matmul %118, %116, %cst_48 {dimension_numbers = #tpu.dot_dimension_numbers<[1], [0], [0], [1], [0, 0, 1, 1], [], []>} : vector<4x64xbf16>, vector<64x160xbf16>, vector<4x160xf32> -> vector<4x160xf32>
    %120 = vector.broadcast %100 : vector<1x160xf32> to vector<4x160xf32>
    %121 = arith.mulf %119, %120 : vector<4x160xf32>
    %cst_49 = arith.constant dense<0.000000e+00> : vector<4xf32>
    %122 = vector.multi_reduction <add>, %121, %cst_49 [1] : vector<4x160xf32> to vector<4xf32>
    %123 = vector.shape_cast %122 : vector<4xf32> to vector<4x1xf32>
    %124 = arith.addf %111, %123 : vector<4x1xf32>
    %125 = arith.mulf %121, %119 : vector<4x160xf32>
    %cst_50 = arith.constant dense<0.000000e+00> : vector<4xf32>
    %126 = vector.multi_reduction <add>, %125, %cst_50 [1] : vector<4x160xf32> to vector<4xf32>
    %127 = vector.shape_cast %126 : vector<4xf32> to vector<4x1xf32>
    %128 = arith.addf %115, %127 : vector<4x1xf32>
    %129 = tpu.concatenate %84, %87, %93, %96 in 0 : vector<16x160xbf16>, vector<16x160xbf16>, vector<16x160xbf16>, vector<16x160xbf16> -> vector<64x160xbf16>
    %c1_51 = arith.constant 1 : index
    %c0_52 = arith.constant 0 : index
    %c0_53 = arith.constant 0 : index
    %c0_54 = arith.constant 0 : index
    %130 = vector.load %arg3[%c1_51, %c0_52, %c0_53, %c0_54] : memref<2x2x4x64xbf16, #tpu.memory_space<vmem>>, vector<1x1x4x64xbf16>
    %131 = vector.shape_cast %130 : vector<1x1x4x64xbf16> to vector<4x64xbf16>
    %cst_55 = arith.constant dense<0.000000e+00> : vector<4x160xf32>
    %132 = tpu.matmul %131, %129, %cst_55 {dimension_numbers = #tpu.dot_dimension_numbers<[1], [0], [0], [1], [0, 0, 1, 1], [], []>} : vector<4x64xbf16>, vector<64x160xbf16>, vector<4x160xf32> -> vector<4x160xf32>
    %133 = vector.broadcast %100 : vector<1x160xf32> to vector<4x160xf32>
    %134 = arith.mulf %132, %133 : vector<4x160xf32>
    %cst_56 = arith.constant dense<0.000000e+00> : vector<4xf32>
    %135 = vector.multi_reduction <add>, %134, %cst_56 [1] : vector<4x160xf32> to vector<4xf32>
    %136 = vector.shape_cast %135 : vector<4xf32> to vector<4x1xf32>
    %137 = arith.addf %124, %136 : vector<4x1xf32>
    %138 = arith.mulf %134, %132 : vector<4x160xf32>
    %cst_57 = arith.constant dense<0.000000e+00> : vector<4xf32>
    %139 = vector.multi_reduction <add>, %138, %cst_57 [1] : vector<4x160xf32> to vector<4xf32>
    %140 = vector.shape_cast %139 : vector<4xf32> to vector<4x1xf32>
    %141 = arith.addf %128, %140 : vector<4x1xf32>
    %142 = tpu.concatenate %87, %90, %96, %99 in 0 : vector<16x160xbf16>, vector<16x160xbf16>, vector<16x160xbf16>, vector<16x160xbf16> -> vector<64x160xbf16>
    %c1_58 = arith.constant 1 : index
    %c1_59 = arith.constant 1 : index
    %c0_60 = arith.constant 0 : index
    %c0_61 = arith.constant 0 : index
    %143 = vector.load %arg3[%c1_58, %c1_59, %c0_60, %c0_61] : memref<2x2x4x64xbf16, #tpu.memory_space<vmem>>, vector<1x1x4x64xbf16>
    %144 = vector.shape_cast %143 : vector<1x1x4x64xbf16> to vector<4x64xbf16>
    %cst_62 = arith.constant dense<0.000000e+00> : vector<4x160xf32>
    %145 = tpu.matmul %144, %142, %cst_62 {dimension_numbers = #tpu.dot_dimension_numbers<[1], [0], [0], [1], [0, 0, 1, 1], [], []>} : vector<4x64xbf16>, vector<64x160xbf16>, vector<4x160xf32> -> vector<4x160xf32>
    %146 = vector.broadcast %100 : vector<1x160xf32> to vector<4x160xf32>
    %147 = arith.mulf %145, %146 : vector<4x160xf32>
    %cst_63 = arith.constant dense<0.000000e+00> : vector<4xf32>
    %148 = vector.multi_reduction <add>, %147, %cst_63 [1] : vector<4x160xf32> to vector<4xf32>
    %149 = vector.shape_cast %148 : vector<4xf32> to vector<4x1xf32>
    %150 = arith.addf %137, %149 : vector<4x1xf32>
    %151 = arith.mulf %147, %145 : vector<4x160xf32>
    %cst_64 = arith.constant dense<0.000000e+00> : vector<4xf32>
    %152 = vector.multi_reduction <add>, %151, %cst_64 [1] : vector<4x160xf32> to vector<4xf32>
    %153 = vector.shape_cast %152 : vector<4xf32> to vector<4x1xf32>
    %154 = arith.addf %141, %153 : vector<4x1xf32>
    %cst_65 = arith.constant 0.001953125 : f32
    %155 = vector.broadcast %cst_65 : f32 to vector<4x1xf32>
    %156 = arith.mulf %150, %155 : vector<4x1xf32>
    %cst_66 = arith.constant 0.001953125 : f32
    %157 = vector.broadcast %cst_66 : f32 to vector<4x1xf32>
    %158 = arith.mulf %154, %157 : vector<4x1xf32>
    %159 = arith.mulf %156, %156 : vector<4x1xf32>
    %160 = arith.subf %158, %159 : vector<4x1xf32>
    %cst_67 = arith.constant 0.000000e+00 : f32
    %161 = vector.broadcast %cst_67 : f32 to vector<4x1xf32>
    %162 = arith.maximumf %160, %161 : vector<4x1xf32>
    %c0_68 = arith.constant 0 : index
    %c0_69 = arith.constant 0 : index
    %163 = vector.load %arg6[%c0_68, %c0_69] : memref<4x1xf32, #tpu.memory_space<vmem>>, vector<4x1xf32>
    %cst_70 = arith.constant 9.99999974E-6 : f32
    %164 = vector.broadcast %cst_70 : f32 to vector<4x1xf32>
    %165 = arith.addf %162, %164 : vector<4x1xf32>
    %166 = math.rsqrt %165 : vector<4x1xf32>
    %167 = arith.mulf %163, %166 : vector<4x1xf32>
    %c0_71 = arith.constant 0 : index
    %c0_72 = arith.constant 0 : index
    %168 = vector.load %arg7[%c0_71, %c0_72] : memref<4x1xf32, #tpu.memory_space<vmem>>, vector<4x1xf32>
    %169 = arith.mulf %156, %167 : vector<4x1xf32>
    %170 = arith.subf %168, %169 : vector<4x1xf32>
    %171 = tpu.concatenate %106, %119, %132, %145 in 1 : vector<4x160xf32>, vector<4x160xf32>, vector<4x160xf32>, vector<4x160xf32> -> vector<4x640xf32>
    %172 = vector.broadcast %167 : vector<4x1xf32> to vector<4x640xf32>
    %173 = arith.mulf %171, %172 : vector<4x640xf32>
    %174 = vector.broadcast %170 : vector<4x1xf32> to vector<4x640xf32>
    %175 = arith.addf %173, %174 : vector<4x640xf32>
    %c0_73 = arith.constant 0 : index
    %c0_74 = arith.constant 0 : index
    %176 = vector.load %arg8[%c0_73, %c0_74] : memref<4x640xf32, #tpu.memory_space<vmem>>, vector<4x640xf32>
    tpu.vector_store %arg8[%c0_73, %c0_74], %175 {strides = array<i32>} : memref<4x640xf32, #tpu.memory_space<vmem>>, vector<4x640xf32>,
    return
  }
  func.func @transform_0(%arg0: i32) -> (i32, i32, i32, i32) {
    %c0_i32 = arith.constant 0 : i32
    %c0_i32_0 = arith.constant 0 : i32
    %c0_i32_1 = arith.constant 0 : i32
    %c0_i32_2 = arith.constant 0 : i32
    %c0_i32_3 = arith.constant 0 : i32
    return %c0_i32, %c0_i32_0, %c0_i32_1, %c0_i32_2 : i32, i32, i32, i32
  }
  func.func @transform_1(%arg0: i32) -> (i32, i32) {
    %c0_i32 = arith.constant 0 : i32
    %c0_i32_0 = arith.constant 0 : i32
    %c0_i32_1 = arith.constant 0 : i32
    return %c0_i32, %c0_i32_0 : i32, i32
  }
  func.func @transform_2(%arg0: i32) -> (i32, i32, i32, i32) {
    %c0_i32 = arith.constant 0 : i32
    %c0_i32_0 = arith.constant 0 : i32
    %c0_i32_1 = arith.constant 0 : i32
    %c0_i32_2 = arith.constant 0 : i32
    %c0_i32_3 = arith.constant 0 : i32
    return %c0_i32, %c0_i32_0, %c0_i32_1, %c0_i32_2 : i32, i32, i32, i32
  }
  func.func @transform_3(%arg0: i32) -> (i32, i32) {
    %c0_i32 = arith.constant 0 : i32
    %c0_i32_0 = arith.constant 0 : i32
    %c0_i32_1 = arith.constant 0 : i32
    return %c0_i32, %c0_i32_0 : i32, i32
  }
  func.func @transform_4(%arg0: i32) -> (i32, i32) {
    %c0_i32 = arith.constant 0 : i32
    %c0_i32_0 = arith.constant 0 : i32
    %c0_i32_1 = arith.constant 0 : i32
    return %c0_i32, %c0_i32_0 : i32, i32
  }
  func.func @transform_5(%arg0: i32) -> (i32, i32) {
    %c0_i32 = arith.constant 0 : i32
    %c0_i32_0 = arith.constant 0 : i32
    %c0_i32_1 = arith.constant 0 : i32
    return %c0_i32, %c0_i32_0 : i32, i32
  }
  func.func @transform_6(%arg0: i32) -> (i32, i32) {
    %c0_i32 = arith.constant 0 : i32
    %c0_i32_0 = arith.constant 0 : i32
    %c0_i32_1 = arith.constant 0 : i32
    return %c0_i32, %c0_i32_0 : i32, i32
  }
  func.func @transform_7(%arg0: i32) -> (i32, i32) {
    %c0_i32 = arith.constant 0 : i32
    %c0_i32_0 = arith.constant 0 : i32
    %c0_i32_1 = arith.constant 0 : i32
    return %c0_i32, %c0_i32_0 : i32, i32
  }
}

</mosaic_0001>

<llo_original>
// kernel: unet_innermost_forward.1
$region0: #{unet_innermost_forward.1}
  #allocation0 [shape = 'u32[]', space=smem, size = 0x4, offset = 0x4, fixed_abs, tag = 'smem constant byte address 0x4 - core index']
  #allocation1 [shape = 'u32[144,128]{1,0:T(1,128)}', space=vmem, size = 0x12000, scoped, tag = 'internal scratch']
  %s0 = inlined_call_operand.vmem [shape: bf16[2,4,16,130], index: 0, kind: input, shape index: {}]
  %s1 = inlined_call_operand.vmem [shape: bf16[16,256], index: 1, kind: input, shape index: {}]
  %s2 = inlined_call_operand.vmem [shape: bf16[2,2,4,64], index: 2, kind: input, shape index: {}]
  %s3 = inlined_call_operand.vmem [shape: f32[1,220], index: 3, kind: input, shape index: {}]
  %s4 = inlined_call_operand.vmem [shape: f32[1,160], index: 4, kind: input, shape index: {}]
  %s5 = inlined_call_operand.vmem [shape: f32[4,1], index: 5, kind: input, shape index: {}]
  %s6 = inlined_call_operand.vmem [shape: f32[4,1], index: 6, kind: input, shape index: {}]
  %s7 = inlined_call_operand.vmem [shape: f32[4,640], index: 7, kind: output, shape index: {}]
  %s8 = sld [smem:[#allocation0]]
  $region38: #{unet_innermost_forward.1} parent=0
    _
  %s10 = ssub.s32 1, %s8
  %s11 = scalar_select 0, %s10, %s8
  // Predicated region
  $region2: #{unet_innermost_forward.1} parent=0 // pred_check
    _
  $region3: #{unet_innermost_forward.1} parent=0 // pred_check_branch
    %13 = sbr.rel (0) target = $region5
  $region4: #{unet_innermost_forward.1} parent=0 // pred_region
    _
  $region5: #{unet_innermost_forward.1} parent=0 // pred_fallthru
    _
  // Predicated region
  $region6: #{unet_innermost_forward.1} parent=0 // pred_check
    _
  $region7: #{unet_innermost_forward.1} parent=0 // pred_check_branch
    %15 = sbr.rel (0) target = $region9
  $region8: #{unet_innermost_forward.1} parent=0 // pred_region
    _
  $region9: #{unet_innermost_forward.1} parent=0 // pred_fallthru
    _
  // Predicated region
  $region10: #{unet_innermost_forward.1} parent=0 // pred_check
    _
  $region11: #{unet_innermost_forward.1} parent=0 // pred_check_branch
    %17 = sbr.rel (0) target = $region13
  $region12: #{unet_innermost_forward.1} parent=0 // pred_region
    _
  $region13: #{unet_innermost_forward.1} parent=0 // pred_fallthru
    _
  // Predicated region
  $region14: #{unet_innermost_forward.1} parent=0 // pred_check
    _
  $region15: #{unet_innermost_forward.1} parent=0 // pred_check_branch
    %19 = sbr.rel (0) target = $region17
  $region16: #{unet_innermost_forward.1} parent=0 // pred_region
    _
  $region17: #{unet_innermost_forward.1} parent=0 // pred_fallthru
    _
  // Predicated region
  $region18: #{unet_innermost_forward.1} parent=0 // pred_check
    _
  $region19: #{unet_innermost_forward.1} parent=0 // pred_check_branch
    %21 = sbr.rel (0) target = $region21
  $region20: #{unet_innermost_forward.1} parent=0 // pred_region
    _
  $region21: #{unet_innermost_forward.1} parent=0 // pred_fallthru
    _
  // Predicated region
  $region22: #{unet_innermost_forward.1} parent=0 // pred_check
    _
  $region23: #{unet_innermost_forward.1} parent=0 // pred_check_branch
    %23 = sbr.rel (0) target = $region25
  $region24: #{unet_innermost_forward.1} parent=0 // pred_region
    _
  $region25: #{unet_innermost_forward.1} parent=0 // pred_fallthru
    _
  // Predicated region
  $region26: #{unet_innermost_forward.1} parent=0 // pred_check
    _
  $region27: #{unet_innermost_forward.1} parent=0 // pred_check_branch
    %25 = sbr.rel (0) target = $region29
  $region28: #{unet_innermost_forward.1} parent=0 // pred_region
    _
  $region29: #{unet_innermost_forward.1} parent=0 // pred_fallthru
    _
  %v27 = vld [vmem:[%s0] sm:$0xff]
  %v28 = vld [vmem:[%s0 + $0x8] sm:$0xff]
  %s29 = scalar_lea.vmem %s0, 16
  %v30 = vld [vmem:[%s29] sm:$0xff]
  %v31 = vld [vmem:[%s29 + $0x8] sm:$0xff]
  %s32 = scalar_lea.vmem %s0, 32
  %v33 = vld [vmem:[%s32] sm:$0xff]
  %v34 = vld [vmem:[%s32 + $0x8] sm:$0xff]
  %s35 = scalar_lea.vmem %s0, 48
  %v36 = vld [vmem:[%s35] sm:$0xff]
  %v37 = vld [vmem:[%s35 + $0x8] sm:$0xff]
  %s38 = scalar_lea.vmem %s0, 64
  %v39 = vld [vmem:[%s38] sm:$0xff]
  %v40 = vld [vmem:[%s38 + $0x8] sm:$0xff]
  %s41 = scalar_lea.vmem %s0, 80
  %v42 = vld [vmem:[%s41] sm:$0xff]
  %v43 = vld [vmem:[%s41 + $0x8] sm:$0xff]
  %s44 = scalar_lea.vmem %s0, 96
  %v45 = vld [vmem:[%s44] sm:$0xff]
  %v46 = vld [vmem:[%s44 + $0x8] sm:$0xff]
  %s47 = scalar_lea.vmem %s0, 112
  %v48 = vld [vmem:[%s47] sm:$0xff]
  %v49 = vld [vmem:[%s47 + $0x8] sm:$0xff]
  %v52 = vunpack.c.l.b16 %v27
  %v53 = vunpack.c.l.b16 %v28
  %v54 = vpack.c.b16 %v53, %v52
  %v57 = vunpack.c.l.b16 %v39
  %v58 = vunpack.c.l.b16 %v40
  %v59 = vpack.c.b16 %v58, %v57
  %60 = vrot.lane.b32.xlu0 %v59, 110
  %v61 = vpop.permute.xlu0 %60
  %vm63 = vcmask 900096
  %v66 = vsel %vm63, %v54, %v61
  %v70 = vunpack.c.l.b16 %v30
  %v71 = vunpack.c.l.b16 %v31
  %v72 = vpack.c.b16 %v71, %v70
  %v75 = vunpack.c.l.b16 %v42
  %v76 = vunpack.c.l.b16 %v43
  %v77 = vpack.c.b16 %v76, %v75
  %78 = vrot.lane.b32.xlu0 %v77, 110
  %v79 = vpop.permute.xlu0 %78
  %v83 = vsel %vm63, %v72, %v79
  %85 = vrot.lane.b32.xlu0 %v54, 127
  %v86 = vpop.permute.xlu0 %85
  %87 = vrot.lane.b32.xlu0 %v59, 109
  %v88 = vpop.permute.xlu0 %87
  %v92 = vsel %vm63, %v86, %v88
  %94 = vrot.lane.b32.xlu0 %v72, 127
  %v95 = vpop.permute.xlu0 %94
  %96 = vrot.lane.b32.xlu0 %v77, 109
  %v97 = vpop.permute.xlu0 %96
  %v101 = vsel %vm63, %v95, %v97
  %v105 = vunpack.c.l.b16 %v33
  %v106 = vunpack.c.l.b16 %v34
  %v107 = vpack.c.b16 %v106, %v105
  %v110 = vunpack.c.l.b16 %v45
  %v111 = vunpack.c.l.b16 %v46
  %v112 = vpack.c.b16 %v111, %v110
  %113 = vrot.lane.b32.xlu0 %v112, 110
  %v114 = vpop.permute.xlu0 %113
  %v118 = vsel %vm63, %v107, %v114
  %v122 = vunpack.c.l.b16 %v36
  %v123 = vunpack.c.l.b16 %v37
  %v124 = vpack.c.b16 %v123, %v122
  %v127 = vunpack.c.l.b16 %v48
  %v128 = vunpack.c.l.b16 %v49
  %v129 = vpack.c.b16 %v128, %v127
  %130 = vrot.lane.b32.xlu0 %v129, 110
  %v131 = vpop.permute.xlu0 %130
  %v135 = vsel %vm63, %v124, %v131
  %137 = vrot.lane.b32.xlu0 %v107, 127
  %v138 = vpop.permute.xlu0 %137
  %139 = vrot.lane.b32.xlu0 %v112, 109
  %v140 = vpop.permute.xlu0 %139
  %v144 = vsel %vm63, %v138, %v140
  %146 = vrot.lane.b32.xlu0 %v124, 127
  %v147 = vpop.permute.xlu0 %146
  %148 = vrot.lane.b32.xlu0 %v129, 109
  %v149 = vpop.permute.xlu0 %148
  %v153 = vsel %vm63, %v147, %v149
  %155 = vrot.lane.b32.xlu0 %v54, 118
  %v156 = vpop.permute.xlu0 %155
  %157 = vrot.lane.b32.xlu0 %v59, 100
  %v158 = vpop.permute.xlu0 %157
  %v162 = vsel %vm63, %v156, %v158
  %164 = vrot.lane.b32.xlu0 %v72, 118
  %v165 = vpop.permute.xlu0 %164
  %166 = vrot.lane.b32.xlu0 %v77, 100
  %v167 = vpop.permute.xlu0 %166
  %v171 = vsel %vm63, %v165, %v167
  %173 = vrot.lane.b32.xlu0 %v54, 117
  %v174 = vpop.permute.xlu0 %173
  %175 = vrot.lane.b32.xlu0 %v59, 99
  %v176 = vpop.permute.xlu0 %175
  %v180 = vsel %vm63, %v174, %v176
  %182 = vrot.lane.b32.xlu0 %v72, 117
  %v183 = vpop.permute.xlu0 %182
  %184 = vrot.lane.b32.xlu0 %v77, 99
  %v185 = vpop.permute.xlu0 %184
  %v189 = vsel %vm63, %v183, %v185
  %191 = vrot.lane.b32.xlu0 %v107, 118
  %v192 = vpop.permute.xlu0 %191
  %193 = vrot.lane.b32.xlu0 %v112, 100
  %v194 = vpop.permute.xlu0 %193
  %v198 = vsel %vm63, %v192, %v194
  %200 = vrot.lane.b32.xlu0 %v124, 118
  %v201 = vpop.permute.xlu0 %200
  %202 = vrot.lane.b32.xlu0 %v129, 100
  %v203 = vpop.permute.xlu0 %202
  %v207 = vsel %vm63, %v201, %v203
  %209 = vrot.lane.b32.xlu0 %v107, 117
  %v210 = vpop.permute.xlu0 %209
  %211 = vrot.lane.b32.xlu0 %v112, 99
  %v212 = vpop.permute.xlu0 %211
  %v216 = vsel %vm63, %v210, %v212
  %218 = vrot.lane.b32.xlu0 %v124, 117
  %v219 = vpop.permute.xlu0 %218
  %220 = vrot.lane.b32.xlu0 %v129, 99
  %v221 = vpop.permute.xlu0 %220
  %v225 = vsel %vm63, %v219, %v221
  %v227 = vld [vmem:[%s1] sm:$0xff]
  %v228 = vld [vmem:[%s1 + $0x8] sm:$0xff]
  %v231 = vunpack.c.l.b16 %v227
  %v232 = vunpack.c.h.b16 %v227
  %v233 = vunpack.c.l.b16 %v228
  %v234 = vunpack.c.h.b16 %v228
  %v235 = vpack.c.b16 %v233, %v231
  %v236 = vpack.c.b16 %v234, %v232
  %239 = vmatprep.subr.bf16.mxu0 %v61
  %240 = vmatpush1.bf16.msra.mxu0 %v66
  %241 = vmatprep.subr.bf16.mxu0 %v79
  %242 = vmatpush1.bf16.msra.mxu0 %v83
  %243 = vmatprep.subr.bf16.mxu0 %v88
  %244 = vmatpush1.bf16.msra.mxu0 %v92
  %245 = vmatprep.subr.bf16.mxu0 %v97
  %246 = vmatpush1.bf16.msra.mxu0 %v101
  %247 = vmatprep.subr.bf16.mxu0 %v114
  %248 = vmatpush1.bf16.msra.mxu0 %v118
  %249 = vmatprep.subr.bf16.mxu0 %v131
  %250 = vmatpush1.bf16.msra.mxu0 %v135
  %251 = vmatprep.subr.bf16.mxu0 %v140
  %252 = vmatpush1.bf16.msra.mxu0 %v144
  %253 = vmatprep.subr.bf16.mxu0 %v149
  %254 = vmatpush1.bf16.msra.mxu0 %v153
  %255 = vmatprep.subr.bf16.mxu0 %v158
  %256 = vmatpush1.bf16.msra.mxu0 %v162
  %257 = vmatprep.subr.bf16.mxu0 %v167
  %258 = vmatpush1.bf16.msra.mxu0 %v171
  %259 = vmatprep.subr.bf16.mxu0 %v176
  %260 = vmatpush1.bf16.msra.mxu0 %v180
  %261 = vmatprep.subr.bf16.mxu0 %v185
  %262 = vmatpush1.bf16.msra.mxu0 %v189
  %263 = vmatprep.subr.bf16.mxu0 %v194
  %264 = vmatpush1.bf16.msra.mxu0 %v198
  %265 = vmatprep.subr.bf16.mxu0 %v203
  %266 = vmatpush1.bf16.msra.mxu0 %v207
  %267 = vmatprep.subr.bf16.mxu0 %v212
  %268 = vmatpush1.bf16.msra.mxu0 %v216
  %269 = vmatprep.subr.bf16.mxu0 %v221
  %270 = vmatpush1.bf16.msra.mxu0 %v225
  %271 = vmatprep.mubr.bf16.mxu0 %v236
  %272 = vmatmul.mubr.bf16.gmra.mrb[0].mxu0 %v235
  %v273 = vpop.f32.mrb[0].mxu0
  %v274 = vadd.f32 0.0, %v273
  %v275 = vpop.f32.mrb[0].mxu0
  %v276 = vadd.f32 0.0, %v275
  %v277 = vpop.f32.mrb[0].mxu0
  %v278 = vadd.f32 0.0, %v277
  %v279 = vpop.f32.mrb[0].mxu0
  %v280 = vadd.f32 0.0, %v279
  %281 = vdwg.mxu0
  %v282 = vmax.f32 %v274, 0.0
  %v283 = vmax.f32 %v276, 0.0
  %v284 = vmax.f32 %v278, 0.0
  %v285 = vmax.f32 %v280, 0.0
  %v286 = vld [vmem:[%s3] sm:$0x3]
  %v288 = vlaneseq
  %v289 = vshrl.u32 %v288, 7
  %v290 = vsub.s32 0, %v289
  %v291 = vrot.slane %v286, %v290
  %v292 = vlaneseq
  %v293 = vshrl.u32 %v292, 7
  %v294 = vsub.s32 1, %v293
  %v295 = vrot.slane %v286, %v294
  %v298 = vmul.f32 %v282, %v291
  %v299 = vmul.f32 %v283, %v295
  %v300 = vmul.f32 %v284, %v291
  %v301 = vmul.f32 %v285, %v295
  %v302 = vpack.c.bf16 %v300, %v298
  %v303 = vpack.c.bf16 %v301, %v299
  %306 = vrot.lane.b32.xlu0 %v302, 98
  %v307 = vpop.permute.xlu0 %306
  %308 = vrot.lane.b32.xlu0 %v303, 98
  %v309 = vpop.permute.xlu0 %308
  %vm310 = vcmask 801792
  %v311 = vsel %vm310, %v307, %v309
  %vm313 = vcmask 654336
  %v316 = vsel %vm313, %v302, %v311
  %318 = vrot.lane.b32.xlu0 %v302, 127
  %v319 = vpop.permute.xlu0 %318
  %320 = vrot.lane.b32.xlu0 %v302, 97
  %v321 = vpop.permute.xlu0 %320
  %322 = vrot.lane.b32.xlu0 %v303, 97
  %v323 = vpop.permute.xlu0 %322
  %vm324 = vcmask 793600
  %v325 = vsel %vm324, %v321, %v323
  %v329 = vsel %vm313, %v319, %v325
  %331 = vrot.lane.b32.xlu0 %v302, 126
  %v332 = vpop.permute.xlu0 %331
  %333 = vrot.lane.b32.xlu0 %v302, 96
  %v334 = vpop.permute.xlu0 %333
  %335 = vrot.lane.b32.xlu0 %v303, 96
  %v336 = vpop.permute.xlu0 %335
  %vm337 = vcmask 785408
  %v338 = vsel %vm337, %v334, %v336
  %v342 = vsel %vm313, %v332, %v338
  %344 = vrot.lane.b32.xlu0 %v302, 118
  %v345 = vpop.permute.xlu0 %344
  %346 = vrot.lane.b32.xlu0 %v302, 88
  %v347 = vpop.permute.xlu0 %346
  %348 = vrot.lane.b32.xlu0 %v303, 88
  %v349 = vpop.permute.xlu0 %348
  %vm350 = vcmask 719872
  %v351 = vsel %vm350, %v347, %v349
  %v355 = vsel %vm313, %v345, %v351
  %357 = vrot.lane.b32.xlu0 %v302, 117
  %v358 = vpop.permute.xlu0 %357
  %359 = vrot.lane.b32.xlu0 %v302, 87
  %v360 = vpop.permute.xlu0 %359
  %361 = vrot.lane.b32.xlu0 %v303, 87
  %v362 = vpop.permute.xlu0 %361
  %vm363 = vcmask 711680
  %v364 = vsel %vm363, %v360, %v362
  %v368 = vsel %vm313, %v358, %v364
  %370 = vrot.lane.b32.xlu0 %v302, 116
  %v371 = vpop.permute.xlu0 %370
  %372 = vrot.lane.b32.xlu0 %v302, 86
  %v373 = vpop.permute.xlu0 %372
  %374 = vrot.lane.b32.xlu0 %v303, 86
  %v375 = vpop.permute.xlu0 %374
  %vm376 = vcmask 703488
  %v377 = vsel %vm376, %v373, %v375
  %v381 = vsel %vm313, %v371, %v377
  %383 = vrot.lane.b32.xlu0 %v302, 108
  %v384 = vpop.permute.xlu0 %383
  %385 = vrot.lane.b32.xlu0 %v303, 78
  %v386 = vpop.permute.xlu0 %385
  %v390 = vsel %vm313, %v384, %v386
  %392 = vrot.lane.b32.xlu0 %v302, 107
  %v393 = vpop.permute.xlu0 %392
  %394 = vrot.lane.b32.xlu0 %v303, 77
  %v395 = vpop.permute.xlu0 %394
  %v399 = vsel %vm313, %v393, %v395
  %401 = vrot.lane.b32.xlu0 %v302, 106
  %v402 = vpop.permute.xlu0 %401
  %403 = vrot.lane.b32.xlu0 %v303, 76
  %v404 = vpop.permute.xlu0 %403
  %v408 = vsel %vm313, %v402, %v404
  %v410 = vld [vmem:[%s4] sm:$0x3]
  %v411 = vld [vmem:[%s2] sm:$0x3]
  %vm412 = vcmask 523264
  %v414 = vsel %vm412, %v411, 0
  %416 = vmatprep.subr.bf16.mxu0 %v309
  %417 = vmatpush1.bf16.msra.mxu0 %v316
  %418 = vmatprep.subr.bf16.mxu0 %v323
  %419 = vmatpush1.bf16.msra.mxu0 %v329
  %420 = vmatprep.subr.bf16.mxu0 %v349
  %421 = vmatpush1.bf16.msra.mxu0 %v355
  %422 = vmatprep.subr.bf16.mxu0 %v362
  %423 = vmatpush1.bf16.msra.mxu0 %v368
  %424 = vmatprep.subr.bf16.mxu0 0
  %425 = vmatpush1.bf16.msra.mxu0 0
  %426 = vmatprep.subr.bf16.mxu0 0
  %427 = vmatpush1.bf16.msra.mxu0 0
  %428 = vmatprep.subr.bf16.mxu0 0
  %429 = vmatpush1.bf16.msra.mxu0 0
  %430 = vmatprep.subr.bf16.mxu0 0
  %431 = vmatpush1.bf16.msra.mxu0 0
  %432 = vmatprep.subr.bf16.mxu0 0
  %433 = vmatpush1.bf16.msra.mxu0 0
  %434 = vmatprep.subr.bf16.mxu0 0
  %435 = vmatpush1.bf16.msra.mxu0 0
  %436 = vmatprep.subr.bf16.mxu0 0
  %437 = vmatpush1.bf16.msra.mxu0 0
  %438 = vmatprep.subr.bf16.mxu0 0
  %439 = vmatpush1.bf16.msra.mxu0 0
  %440 = vmatprep.subr.bf16.mxu0 0
  %441 = vmatpush1.bf16.msra.mxu0 0
  %442 = vmatprep.subr.bf16.mxu0 0
  %443 = vmatpush1.bf16.msra.mxu0 0
  %444 = vmatprep.subr.bf16.mxu0 0
  %445 = vmatpush1.bf16.msra.mxu0 0
  %446 = vmatprep.subr.bf16.mxu0 0
  %447 = vmatpush1.bf16.msra.mxu0 0
  %448 = vmatprep.mubr.bf16.mxu0 0
  %449 = vmatmul.mubr.bf16.gmra.mrb[0].mxu0 %v414
  %v450 = vpop.f32.mrb[0].mxu0
  %v451 = vadd.f32 0.0, %v450
  %v452 = vpop.f32.mrb[0].mxu0
  %v453 = vadd.f32 0.0, %v452
  %v454 = vpop.f32.mrb[0].mxu0
  %v455 = vpop.f32.mrb[0].mxu0
  %456 = vdwg.mxu0
  %v458 = vlaneseq
  %v459 = vshrl.u32 %v458, 7
  %v460 = vsub.s32 0, %v459
  %v461 = vrot.slane %v410, %v460
  %v462 = vlaneseq
  %v463 = vshrl.u32 %v462, 7
  %v464 = vsub.s32 1, %v463
  %v465 = vrot.slane %v410, %v464
  %v468 = vmul.f32 %v451, %v461
  %v469 = vmul.f32 %v453, %v465
  %vm470 = vcmask 1043456
  %v471 = vsel %vm470, %v468, 0.0
  %vm472 = vcmask 257024
  %v473 = vsel %vm472, %v469, 0.0
  %v474 = vadd.f32 %v471, %v473
  %475 = vadd.xlane.f32.xlu0 %v474
  %v476 = vpop.xlane.xlu0 %475
  %v477 = vadd.f32 %v476, 0.0
  %v478 = vmul.f32 %v468, %v451
  %v479 = vmul.f32 %v469, %v453
  %v480 = vsel %vm470, %v478, 0.0
  %v481 = vsel %vm472, %v479, 0.0
  %v482 = vadd.f32 %v480, %v481
  %483 = vadd.xlane.f32.xlu0 %v482
  %v484 = vpop.xlane.xlu0 %483
  %v485 = vadd.f32 %v484, 0.0
  %s486 = scalar_lea.vmem %s2, 2
  %v487 = vld [vmem:[%s486] sm:$0x3]
  %v489 = vsel %vm412, %v487, 0
  %491 = vmatprep.subr.bf16.mxu0 %v323
  %492 = vmatpush1.bf16.msra.mxu0 %v329
  %493 = vmatprep.subr.bf16.mxu0 %v336
  %494 = vmatpush1.bf16.msra.mxu0 %v342
  %495 = vmatprep.subr.bf16.mxu0 %v362
  %496 = vmatpush1.bf16.msra.mxu0 %v368
  %497 = vmatprep.subr.bf16.mxu0 %v375
  %498 = vmatpush1.bf16.msra.mxu0 %v381
  %499 = vmatprep.subr.bf16.mxu0 0
  %500 = vmatpush1.bf16.msra.mxu0 0
  %501 = vmatprep.subr.bf16.mxu0 0
  %502 = vmatpush1.bf16.msra.mxu0 0
  %503 = vmatprep.subr.bf16.mxu0 0
  %504 = vmatpush1.bf16.msra.mxu0 0
  %505 = vmatprep.subr.bf16.mxu0 0
  %506 = vmatpush1.bf16.msra.mxu0 0
  %507 = vmatprep.subr.bf16.mxu0 0
  %508 = vmatpush1.bf16.msra.mxu0 0
  %509 = vmatprep.subr.bf16.mxu0 0
  %510 = vmatpush1.bf16.msra.mxu0 0
  %511 = vmatprep.subr.bf16.mxu0 0
  %512 = vmatpush1.bf16.msra.mxu0 0
  %513 = vmatprep.subr.bf16.mxu0 0
  %514 = vmatpush1.bf16.msra.mxu0 0
  %515 = vmatprep.subr.bf16.mxu0 0
  %516 = vmatpush1.bf16.msra.mxu0 0
  %517 = vmatprep.subr.bf16.mxu0 0
  %518 = vmatpush1.bf16.msra.mxu0 0
  %519 = vmatprep.subr.bf16.mxu0 0
  %520 = vmatpush1.bf16.msra.mxu0 0
  %521 = vmatprep.subr.bf16.mxu0 0
  %522 = vmatpush1.bf16.msra.mxu0 0
  %523 = vmatprep.mubr.bf16.mxu0 0
  %524 = vmatmul.mubr.bf16.gmra.mrb[0].mxu0 %v489
  %v525 = vpop.f32.mrb[0].mxu0
  %v526 = vadd.f32 0.0, %v525
  %v527 = vpop.f32.mrb[0].mxu0
  %v528 = vadd.f32 0.0, %v527
  %v529 = vpop.f32.mrb[0].mxu0
  %v530 = vpop.f32.mrb[0].mxu0
  %531 = vdwg.mxu0
  %v532 = vmul.f32 %v526, %v461
  %v533 = vmul.f32 %v528, %v465
  %v534 = vsel %vm470, %v532, 0.0
  %v535 = vsel %vm472, %v533, 0.0
  %v536 = vadd.f32 %v534, %v535
  %537 = vadd.xlane.f32.xlu0 %v536
  %v538 = vpop.xlane.xlu0 %537
  %v539 = vadd.f32 %v477, %v538
  %v540 = vmul.f32 %v532, %v526
  %v541 = vmul.f32 %v533, %v528
  %v542 = vsel %vm470, %v540, 0.0
  %v543 = vsel %vm472, %v541, 0.0
  %v544 = vadd.f32 %v542, %v543
  %545 = vadd.xlane.f32.xlu0 %v544
  %v546 = vpop.xlane.xlu0 %545
  %v547 = vadd.f32 %v485, %v546
  %s548 = scalar_lea.vmem %s2, 4
  %v549 = vld [vmem:[%s548] sm:$0x3]
  %v551 = vsel %vm412, %v549, 0
  %553 = vmatprep.subr.bf16.mxu0 %v349
  %554 = vmatpush1.bf16.msra.mxu0 %v355
  %555 = vmatprep.subr.bf16.mxu0 %v362
  %556 = vmatpush1.bf16.msra.mxu0 %v368
  %557 = vmatprep.subr.bf16.mxu0 %v386
  %558 = vmatpush1.bf16.msra.mxu0 %v390
  %559 = vmatprep.subr.bf16.mxu0 %v395
  %560 = vmatpush1.bf16.msra.mxu0 %v399
  %561 = vmatprep.subr.bf16.mxu0 0
  %562 = vmatpush1.bf16.msra.mxu0 0
  %563 = vmatprep.subr.bf16.mxu0 0
  %564 = vmatpush1.bf16.msra.mxu0 0
  %565 = vmatprep.subr.bf16.mxu0 0
  %566 = vmatpush1.bf16.msra.mxu0 0
  %567 = vmatprep.subr.bf16.mxu0 0
  %568 = vmatpush1.bf16.msra.mxu0 0
  %569 = vmatprep.subr.bf16.mxu0 0
  %570 = vmatpush1.bf16.msra.mxu0 0
  %571 = vmatprep.subr.bf16.mxu0 0
  %572 = vmatpush1.bf16.msra.mxu0 0
  %573 = vmatprep.subr.bf16.mxu0 0
  %574 = vmatpush1.bf16.msra.mxu0 0
  %575 = vmatprep.subr.bf16.mxu0 0
  %576 = vmatpush1.bf16.msra.mxu0 0
  %577 = vmatprep.subr.bf16.mxu0 0
  %578 = vmatpush1.bf16.msra.mxu0 0
  %579 = vmatprep.subr.bf16.mxu0 0
  %580 = vmatpush1.bf16.msra.mxu0 0
  %581 = vmatprep.subr.bf16.mxu0 0
  %582 = vmatpush1.bf16.msra.mxu0 0
  %583 = vmatprep.subr.bf16.mxu0 0
  %584 = vmatpush1.bf16.msra.mxu0 0
  %585 = vmatprep.mubr.bf16.mxu0 0
  %586 = vmatmul.mubr.bf16.gmra.mrb[0].mxu0 %v551
  %v587 = vpop.f32.mrb[0].mxu0
  %v588 = vadd.f32 0.0, %v587
  %v589 = vpop.f32.mrb[0].mxu0
  %v590 = vadd.f32 0.0, %v589
  %v591 = vpop.f32.mrb[0].mxu0
  %v592 = vpop.f32.mrb[0].mxu0
  %593 = vdwg.mxu0
  %v594 = vmul.f32 %v588, %v461
  %v595 = vmul.f32 %v590, %v465
  %v596 = vsel %vm470, %v594, 0.0
  %v597 = vsel %vm472, %v595, 0.0
  %v598 = vadd.f32 %v596, %v597
  %599 = vadd.xlane.f32.xlu0 %v598
  %v600 = vpop.xlane.xlu0 %599
  %v601 = vadd.f32 %v539, %v600
  %v602 = vmul.f32 %v594, %v588
  %v603 = vmul.f32 %v595, %v590
  %v604 = vsel %vm470, %v602, 0.0
  %v605 = vsel %vm472, %v603, 0.0
  %v606 = vadd.f32 %v604, %v605
  %607 = vadd.xlane.f32.xlu0 %v606
  %v608 = vpop.xlane.xlu0 %607
  %v609 = vadd.f32 %v547, %v608
  %s610 = scalar_lea.vmem %s2, 6
  %v611 = vld [vmem:[%s610] sm:$0x3]
  %v613 = vsel %vm412, %v611, 0
  %615 = vmatprep.subr.bf16.mxu0 %v362
  %616 = vmatpush1.bf16.msra.mxu0 %v368
  %617 = vmatprep.subr.bf16.mxu0 %v375
  %618 = vmatpush1.bf16.msra.mxu0 %v381
  %619 = vmatprep.subr.bf16.mxu0 %v395
  %620 = vmatpush1.bf16.msra.mxu0 %v399
  %621 = vmatprep.subr.bf16.mxu0 %v404
  %622 = vmatpush1.bf16.msra.mxu0 %v408
  %623 = vmatprep.subr.bf16.mxu0 0
  %624 = vmatpush1.bf16.msra.mxu0 0
  %625 = vmatprep.subr.bf16.mxu0 0
  %626 = vmatpush1.bf16.msra.mxu0 0
  %627 = vmatprep.subr.bf16.mxu0 0
  %628 = vmatpush1.bf16.msra.mxu0 0
  %629 = vmatprep.subr.bf16.mxu0 0
  %630 = vmatpush1.bf16.msra.mxu0 0
  %631 = vmatprep.subr.bf16.mxu0 0
  %632 = vmatpush1.bf16.msra.mxu0 0
  %633 = vmatprep.subr.bf16.mxu0 0
  %634 = vmatpush1.bf16.msra.mxu0 0
  %635 = vmatprep.subr.bf16.mxu0 0
  %636 = vmatpush1.bf16.msra.mxu0 0
  %637 = vmatprep.subr.bf16.mxu0 0
  %638 = vmatpush1.bf16.msra.mxu0 0
  %639 = vmatprep.subr.bf16.mxu0 0
  %640 = vmatpush1.bf16.msra.mxu0 0
  %641 = vmatprep.subr.bf16.mxu0 0
  %642 = vmatpush1.bf16.msra.mxu0 0
  %643 = vmatprep.subr.bf16.mxu0 0
  %644 = vmatpush1.bf16.msra.mxu0 0
  %645 = vmatprep.subr.bf16.mxu0 0
  %646 = vmatpush1.bf16.msra.mxu0 0
  %647 = vmatprep.mubr.bf16.mxu0 0
  %648 = vmatmul.mubr.bf16.gmra.mrb[0].mxu0 %v613
  %v649 = vpop.f32.mrb[0].mxu0
  %v650 = vadd.f32 0.0, %v649
  %v651 = vpop.f32.mrb[0].mxu0
  %v652 = vadd.f32 0.0, %v651
  %v653 = vpop.f32.mrb[0].mxu0
  %v654 = vpop.f32.mrb[0].mxu0
  %655 = vdwg.mxu0
  %v656 = vmul.f32 %v650, %v461
  %v657 = vmul.f32 %v652, %v465
  %v658 = vsel %vm470, %v656, 0.0
  %v659 = vsel %vm472, %v657, 0.0
  %v660 = vadd.f32 %v658, %v659
  %661 = vadd.xlane.f32.xlu0 %v660
  %v662 = vpop.xlane.xlu0 %661
  %v663 = vadd.f32 %v601, %v662
  %v664 = vmul.f32 %v656, %v650
  %v665 = vmul.f32 %v657, %v652
  %v666 = vsel %vm470, %v664, 0.0
  %v667 = vsel %vm472, %v665, 0.0
  %v668 = vadd.f32 %v666, %v667
  %669 = vadd.xlane.f32.xlu0 %v668
  %v670 = vpop.xlane.xlu0 %669
  %v671 = vadd.f32 %v609, %v670
  %v672 = vmul.f32 %v663, 0.001953125
  %v673 = vmul.f32 %v671, 0.001953125
  %v674 = vmul.f32 %v672, %v672
  %v675 = vsub.f32 %v673, %v674
  %v676 = vmax.f32 %v675, 0.0
  %v677 = vld [vmem:[%s5] sm:$0xf]
  %v678 = vadd.f32 %v676, 1e-05
  %v679 = vrsqrt.pop %v678
  %v680 = vmul.f32 %v677, %v679
  %v681 = vld [vmem:[%s6] sm:$0xf]
  %v682 = vmul.f32 %v672, %v680
  %v683 = vsub.f32 %v681, %v682
  %686 = vrot.lane.b32.xlu0 %v526, 32
  %v687 = vpop.permute.xlu0 %686
  %688 = vrot.lane.b32.xlu0 %v528, 32
  %v689 = vpop.permute.xlu0 %688
  %vm690 = vcmask 261120
  %v691 = vsel %vm690, %v687, %v689
  %696 = vrot.lane.b32.xlu0 %v588, 64
  %v697 = vpop.permute.xlu0 %696
  %698 = vrot.lane.b32.xlu0 %v590, 64
  %v699 = vpop.permute.xlu0 %698
  %v700 = vsel %vm412, %v697, %v699
  %705 = vrot.lane.b32.xlu0 %v650, 96
  %v706 = vpop.permute.xlu0 %705
  %707 = vrot.lane.b32.xlu0 %v652, 96
  %v708 = vpop.permute.xlu0 %707
  %vm709 = vcmask 785408
  %v710 = vsel %vm709, %v706, %v708
  %v713 = vsel %vm690, %v453, %v687
  %v714 = vsel %vm412, %v691, %v697
  %v715 = vsel %vm709, %v700, %v706
  %717 = vset.pattern.permute.xlu0 0
  %718 = vperm.xlu0 %717, %v680
  %v719 = vpop.permute.xlu0 %718
  %v721 = vmul.f32 %v451, %v719
  %v722 = vmul.f32 %v713, %v719
  %v723 = vmul.f32 %v714, %v719
  %v724 = vmul.f32 %v715, %v719
  %v725 = vmul.f32 %v710, %v719
  %727 = vset.pattern.permute.xlu0 0
  %728 = vperm.xlu0 %727, %v683
  %v729 = vpop.permute.xlu0 %728
  %v731 = vadd.f32 %v721, %v729
  %v732 = vadd.f32 %v722, %v729
  %v733 = vadd.f32 %v723, %v729
  %v734 = vadd.f32 %v724, %v729
  %v735 = vadd.f32 %v725, %v729
  %v740 = vcombine.low %v731, %v732
  %v741 = vcombine.low %v733, %v734
  %744 = vst [vmem:[%s7] sm:$0xff] %v740
  %745 = vst [vmem:[%s7 + $0x8] sm:$0xff] %v741
  %746 = vst [vmem:[%s7 + $0x10] sm:$0xf] %v735
  // Predicated region
  $region30: #{unet_innermost_forward.1} parent=0 // pred_check
    _
  $region31: #{unet_innermost_forward.1} parent=0 // pred_check_branch
    %748 = sbr.rel (0) target = $region33
  $region32: #{unet_innermost_forward.1} parent=0 // pred_region
    _
  $region33: #{unet_innermost_forward.1} parent=0 // pred_fallthru
    _
  // Predicated region
  $region34: #{unet_innermost_forward.1} parent=0 // pred_check
    _
  $region35: #{unet_innermost_forward.1} parent=0 // pred_check_branch
    %750 = sbr.rel (0) target = $region37
  $region36: #{unet_innermost_forward.1} parent=0 // pred_region
    _
  $region37: #{unet_innermost_forward.1} parent=0 // pred_fallthru
    _

</llo_original>
